<compile_context>
chip_gen: v6e
topology: v6e:2x2x1
jax: 0.10.0
libtpu: 0.0.40
codegen_flags: <defaults>
</compile_context>

<pallas_src>
import functools

import jax
import jax.numpy as jnp
from jax.experimental import pallas as pl
from jax.experimental.pallas import tpu as pltpu

HP = 64            # padded hidden per branch (10 -> 64); fused hidden = 2*HP = 128 lanes
OUT_PAD = 128      # lane-dense fused output width (n_actions + 1 padded to 128)


# ----------------------------- kernel ---------------------------------------
def fused_actor_critic_kernel(x_ref, w1_ref, b1_ref, w2_ref, b2_ref, out_ref):
    # x: [TB, D] f32, w1: [D, 2*HP] bf16, b1: [1, 2*HP] f32,
    # w2: [2*HP, OUT_PAD] bf16, b2: [1, OUT_PAD] f32, out: [TB, OUT_PAD] bf16
    x = x_ref[...].astype(jnp.bfloat16)                       # in-kernel cast (VPU, hidden under DMA/MXU)
    h = jnp.dot(x, w1_ref[...], preferred_element_type=jnp.float32) + b1_ref[...]
    h = jnp.maximum(h, 0.0)                                   # fused ReLU (f32, VPU)
    out = jnp.dot(h.astype(jnp.bfloat16), w2_ref[...],
                  preferred_element_type=jnp.float32) + b2_ref[...]
    out_ref[...] = out.astype(out_ref.dtype)                  # bf16 writeback (halved HBM traffic)


# ----------------------------- wrapper ---------------------------------------
def _round_up(x, m):
    return ((x + m - 1) // m) * m


def _choose_tiling(B, cap=2048, large_threshold=256, min_steps_when_large=2):
    """Pick (TB, B_pad, nb): minimal padding, >=2 steps for large B (v7x megacore)."""
    nb = max(-(-B // cap), 1)
    if B >= large_threshold:
        nb = max(nb, min_steps_when_large)
    TB = _round_up(-(-B // nb), 16)        # 16-row tiles: native sublane tiling for bf16 output
    B_pad = _round_up(B, TB)
    nb = B_pad // TB
    return TB, B_pad, nb


def fuse_params(params, input_dims, n_actions):
    """Build fused / padded / bf16 weights from the raw per-layer params."""
    f32 = jnp.float32
    # First layer: [D, 2*HP]  (actor hidden in cols 0:HP, critic hidden in HP:2HP)
    w1 = jnp.zeros((input_dims, 2 * HP), f32)
    w1 = w1.at[:, 0:10].set(params["pi1_w"])
    w1 = w1.at[:, HP:HP + 10].set(params["v1_w"])
    b1 = jnp.zeros((1, 2 * HP), f32)
    b1 = b1.at[:, 0:10].set(params["pi1_b"])
    b1 = b1.at[:, HP:HP + 10].set(params["v1_b"])
    # Second layer: block-diagonal [2*HP, OUT_PAD]
    w2 = jnp.zeros((2 * HP, OUT_PAD), f32)
    w2 = w2.at[0:10, 0:n_actions].set(params["pi_w"])
    w2 = w2.at[HP:HP + 10, n_actions:n_actions + 1].set(params["v_w"])
    b2 = jnp.zeros((1, OUT_PAD), f32)
    b2 = b2.at[:, 0:n_actions].set(params["pi_b"])
    b2 = b2.at[:, n_actions:n_actions + 1].set(params["v_b"])
    return {
        "w1": w1.astype(jnp.bfloat16), "b1": b1,
        "w2": w2.astype(jnp.bfloat16), "b2": b2,
    }


@functools.partial(jax.jit, static_argnames=("n_actions",))
def actor_critic_forward(state, fused, n_actions):
    """state: [B, D] float32. Returns (pi [B, n_actions], v [B, 1]) in float32."""
    B, D = state.shape
    TB, B_pad, nb = _choose_tiling(B)
    x = state                                   # stays f32; bf16 cast happens in-kernel
    if B_pad != B:
        x = jnp.pad(x, ((0, B_pad - B), (0, 0)))

    flops = 2 * B_pad * D * (2 * HP) + 2 * B_pad * (2 * HP) * OUT_PAD
    bytes_accessed = (B_pad * D * 4                       # f32 input read
                      + B_pad * OUT_PAD * 2               # bf16 output write
                      + (D * 2 * HP + 2 * HP * OUT_PAD) * 2   # bf16 weights
                      + (2 * HP + OUT_PAD) * 4)           # f32 biases

    out = pl.pallas_call(
        fused_actor_critic_kernel,
        out_shape=jax.ShapeDtypeStruct((B_pad, OUT_PAD), jnp.bfloat16),
        grid=(nb,),
        in_specs=[
            pl.BlockSpec((TB, D), lambda i: (i, 0)),              # state tile (f32)
            pl.BlockSpec((D, 2 * HP), lambda i: (0, 0)),          # fused W1 (bf16)
            pl.BlockSpec((1, 2 * HP), lambda i: (0, 0)),          # fused b1 (f32)
            pl.BlockSpec((2 * HP, OUT_PAD), lambda i: (0, 0)),    # block-diag W2 (bf16)
            pl.BlockSpec((1, OUT_PAD), lambda i: (0, 0)),         # fused b2 (f32)
        ],
        out_specs=pl.BlockSpec((TB, OUT_PAD), lambda i: (i, 0)),  # lane-dense bf16 output
        compiler_params=pltpu.CompilerParams(
            dimension_semantics=("parallel",)),
        cost_estimate=pl.CostEstimate(
            flops=flops, transcendentals=0, bytes_accessed=bytes_accessed),
    )(x, fused["w1"], fused["b1"], fused["w2"], fused["b2"])

    # Single contiguous slice of the packed output, then split pi/v (upcast once).
    packed = out[:B, :n_actions + 1].astype(jnp.float32)
    pi = packed[:, :n_actions]
    v = packed[:, n_actions:n_actions + 1]
    return pi, v


# ----------------------------- params / references ---------------------------
def init_params(key, input_dims, n_actions, hidden=10):
    # PyTorch-default-style uniform init; weights stored pre-transposed [in, out].
    ks = jax.random.split(key, 8)

    def lin(kw, kb, fan_in, fan_out):
        bound = 1.0 / jnp.sqrt(jnp.float32(fan_in))
        w = jax.random.uniform(kw, (fan_in, fan_out), jnp.float32, -bound, bound)
        b = jax.random.uniform(kb, (1, fan_out), jnp.float32, -bound, bound)
        return w, b

    pi1_w, pi1_b = lin(ks[0], ks[1], input_dims, hidden)
    v1_w, v1_b = lin(ks[2], ks[3], input_dims, hidden)
    pi_w, pi_b = lin(ks[4], ks[5], hidden, n_actions)
    v_w, v_b = lin(ks[6], ks[7], hidden, 1)
    return dict(pi1_w=pi1_w, pi1_b=pi1_b, v1_w=v1_w, v1_b=v1_b,
                pi_w=pi_w, pi_b=pi_b, v_w=v_w, v_b=v_b)


def reference_forward_f32(state, p):
    # Original module semantics, pure f32.
    pi1 = jnp.maximum(state @ p["pi1_w"] + p["pi1_b"], 0.0)
    v1 = jnp.maximum(state @ p["v1_w"] + p["v1_b"], 0.0)
    return pi1 @ p["pi_w"] + p["pi_b"], v1 @ p["v_w"] + p["v_b"]


def reference_forward_bf16(state, fused, n_actions):
    # Mirrors the kernel's numerics (bf16 operands, f32 acc, bf16 output) exactly.
    x = state.astype(jnp.bfloat16).astype(jnp.float32)
    w1 = fused["w1"].astype(jnp.float32)
    w2 = fused["w2"].astype(jnp.float32)
    h = jnp.maximum(x @ w1 + fused["b1"], 0.0)
    h = h.astype(jnp.bfloat16).astype(jnp.float32)
    out = (h @ w2 + fused["b2"]).astype(jnp.bfloat16).astype(jnp.float32)
    return out[:, :n_actions], out[:, n_actions:n_actions + 1]


# ----------------------------- main ------------------------------------------
if __name__ == "__main__":
    key = jax.random.PRNGKey(0)
    k_state, k_params = jax.random.split(key)

    batch, input_dims, n_actions = 8, 32, 4
    state = jax.random.normal(k_state, (batch, input_dims), jnp.float32)
    params = init_params(k_params, input_dims, n_actions)
    fused = fuse_params(params, input_dims, n_actions)

    pi, v = actor_critic_forward(state, fused, n_actions)
    pi, v = jax.block_until_ready((pi, v))
    assert pi.shape == (batch, n_actions) and v.shape == (batch, 1)

    # Tight check vs. a reference with identical (bf16 operand / f32 acc / bf16 out) numerics.
    pi_ref_b, v_ref_b = reference_forward_bf16(state, fused, n_actions)
    assert jnp.allclose(pi, pi_ref_b, atol=1e-2, rtol=1e-2)
    assert jnp.allclose(v, v_ref_b, atol=1e-2, rtol=1e-2)

    # Looser check vs. the original pure-f32 module semantics (bf16 rounding only).
    pi_ref, v_ref = reference_forward_f32(state, params)
    assert jnp.allclose(pi, pi_ref, atol=3e-2, rtol=3e-2)
    assert jnp.allclose(v, v_ref, atol=3e-2, rtol=3e-2)

    print("KERNEL_OK")
</pallas_src>

<mosaic_0001>
module attributes {stable_mosaic.version = 11 : i64} {
  func.func @fused_actor_critic_kernel(%arg0: i32, %arg1: memref<16x32xf32, #tpu.memory_space<vmem>>, %arg2: memref<32x128xbf16, #tpu.memory_space<vmem>>, %arg3: memref<1x128xf32, #tpu.memory_space<vmem>>, %arg4: memref<128x128xbf16, #tpu.memory_space<vmem>>, %arg5: memref<1x128xf32, #tpu.memory_space<vmem>>, %arg6: memref<16x128xbf16, #tpu.memory_space<vmem>>) attributes {dimension_semantics = [#tpu.dimension_semantics<parallel>], iteration_bounds = array<i64: 1>, scalar_prefetch = 0 : i64, scratch_operands = 0 : i64, tpu.core_type = #tpu.core_type<tc>, window_params = [{transform_indices = @transform_0, window_bounds = array<i64: 16, 32>}, {pipeline_mode = #tpu.pipeline_mode<synchronous>, transform_indices = @transform_1, window_bounds = array<i64: 32, 128>}, {pipeline_mode = #tpu.pipeline_mode<synchronous>, transform_indices = @transform_2, window_bounds = array<i64: 1, 128>}, {pipeline_mode = #tpu.pipeline_mode<synchronous>, transform_indices = @transform_3, window_bounds = array<i64: 128, 128>}, {pipeline_mode = #tpu.pipeline_mode<synchronous>, transform_indices = @transform_4, window_bounds = array<i64: 1, 128>}, {transform_indices = @transform_5, window_bounds = array<i64: 16, 128>}]} {
    %c0 = arith.constant 0 : index
    %c0_0 = arith.constant 0 : index
    %0 = vector.load %arg1[%c0, %c0_0] : memref<16x32xf32, #tpu.memory_space<vmem>>, vector<16x32xf32>
    %1 = arith.truncf %0 : vector<16x32xf32> to vector<16x32xbf16>
    %c0_1 = arith.constant 0 : index
    %c0_2 = arith.constant 0 : index
    %2 = vector.load %arg2[%c0_1, %c0_2] : memref<32x128xbf16, #tpu.memory_space<vmem>>, vector<32x128xbf16>
    %cst = arith.constant dense<0.000000e+00> : vector<16x128xf32>
    %3 = tpu.matmul %1, %2, %cst {dimension_numbers = #tpu.dot_dimension_numbers<[1], [0], [0], [1], [0, 0, 1, 1], [], []>} : vector<16x32xbf16>, vector<32x128xbf16>, vector<16x128xf32> -> vector<16x128xf32>
    %c0_3 = arith.constant 0 : index
    %c0_4 = arith.constant 0 : index
    %4 = vector.load %arg3[%c0_3, %c0_4] : memref<1x128xf32, #tpu.memory_space<vmem>>, vector<1x128xf32>
    %5 = vector.broadcast %4 : vector<1x128xf32> to vector<16x128xf32>
    %6 = arith.addf %3, %5 : vector<16x128xf32>
    %cst_5 = arith.constant 0.000000e+00 : f32
    %7 = vector.broadcast %cst_5 : f32 to vector<16x128xf32>
    %8 = arith.maximumf %6, %7 : vector<16x128xf32>
    %9 = arith.truncf %8 : vector<16x128xf32> to vector<16x128xbf16>
    %c0_6 = arith.constant 0 : index
    %c0_7 = arith.constant 0 : index
    %10 = vector.load %arg4[%c0_6, %c0_7] : memref<128x128xbf16, #tpu.memory_space<vmem>>, vector<128x128xbf16>
    %cst_8 = arith.constant dense<0.000000e+00> : vector<16x128xf32>
    %11 = tpu.matmul %9, %10, %cst_8 {dimension_numbers = #tpu.dot_dimension_numbers<[1], [0], [0], [1], [0, 0, 1, 1], [], []>} : vector<16x128xbf16>, vector<128x128xbf16>, vector<16x128xf32> -> vector<16x128xf32>
    %c0_9 = arith.constant 0 : index
    %c0_10 = arith.constant 0 : index
    %12 = vector.load %arg5[%c0_9, %c0_10] : memref<1x128xf32, #tpu.memory_space<vmem>>, vector<1x128xf32>
    %13 = vector.broadcast %12 : vector<1x128xf32> to vector<16x128xf32>
    %14 = arith.addf %11, %13 : vector<16x128xf32>
    %15 = arith.truncf %14 : vector<16x128xf32> to vector<16x128xbf16>
    %c0_11 = arith.constant 0 : index
    %c0_12 = arith.constant 0 : index
    %16 = vector.load %arg6[%c0_11, %c0_12] : memref<16x128xbf16, #tpu.memory_space<vmem>>, vector<16x128xbf16>
    tpu.vector_store %arg6[%c0_11, %c0_12], %15 {strides = array<i32>} : memref<16x128xbf16, #tpu.memory_space<vmem>>, vector<16x128xbf16>,
    return
  }
  func.func @transform_0(%arg0: i32) -> (i32, i32) {
    %c0_i32 = arith.constant 0 : i32
    %c0_i32_0 = arith.constant 0 : i32
    return %arg0, %c0_i32 : i32, i32
  }
  func.func @transform_1(%arg0: i32) -> (i32, i32) {
    %c0_i32 = arith.constant 0 : i32
    %c0_i32_0 = arith.constant 0 : i32
    %c0_i32_1 = arith.constant 0 : i32
    return %c0_i32, %c0_i32_0 : i32, i32
  }
  func.func @transform_2(%arg0: i32) -> (i32, i32) {
    %c0_i32 = arith.constant 0 : i32
    %c0_i32_0 = arith.constant 0 : i32
    %c0_i32_1 = arith.constant 0 : i32
    return %c0_i32, %c0_i32_0 : i32, i32
  }
  func.func @transform_3(%arg0: i32) -> (i32, i32) {
    %c0_i32 = arith.constant 0 : i32
    %c0_i32_0 = arith.constant 0 : i32
    %c0_i32_1 = arith.constant 0 : i32
    return %c0_i32, %c0_i32_0 : i32, i32
  }
  func.func @transform_4(%arg0: i32) -> (i32, i32) {
    %c0_i32 = arith.constant 0 : i32
    %c0_i32_0 = arith.constant 0 : i32
    %c0_i32_1 = arith.constant 0 : i32
    return %c0_i32, %c0_i32_0 : i32, i32
  }
  func.func @transform_5(%arg0: i32) -> (i32, i32) {
    %c0_i32 = arith.constant 0 : i32
    %c0_i32_0 = arith.constant 0 : i32
    return %arg0, %c0_i32 : i32, i32
  }
}

</mosaic_0001>

<llo_original>
// kernel: actor_critic_forward.1
$region0: #{actor_critic_forward.1}
  #allocation0 [shape = 'u32[]', space=smem, size = 0x4, offset = 0x4, fixed_abs, tag = 'smem constant byte address 0x4 - core index']
  #allocation1 [shape = 'u32[144,128]{1,0:T(1,128)}', space=vmem, size = 0x12000, scoped, tag = 'internal scratch']
  %s0 = inlined_call_operand.vmem [shape: f32[16,32], index: 0, kind: input, shape index: {}]
  %s1 = inlined_call_operand.vmem [shape: bf16[32,128], index: 1, kind: input, shape index: {}]
  %s2 = inlined_call_operand.vmem [shape: f32[1,128], index: 2, kind: input, shape index: {}]
  %s3 = inlined_call_operand.hbm [shape: bf16[128,128], index: 3, kind: input, shape index: {}]
  %s4 = inlined_call_operand.vmem [shape: f32[1,128], index: 4, kind: input, shape index: {}]
  %s5 = inlined_call_operand.vmem [shape: bf16[16,128], index: 5, kind: output, shape index: {}]
  %s6 = sld [smem:[#allocation0]]
  $region34: #{actor_critic_forward.1} parent=0
    _
  %s8 = ssub.s32 1, %s6
  %s9 = scalar_select 0, %s8, %s6
  $region1: #{actor_critic_forward.1} parent=0
    #allocation2 [shape = 'u8[32768]{0}', space=vmem, size = 0x8000, scoped, tag = 'input window, operand 3, single buffered']
    #allocation3 [shape = 's32[1]{0}', space=sflag, size = 0x4, scoped, tag = 'scoped memory for actor_critic_forward.1']
    %10 = vsyncpa [#allocation3], 0
    // Predicated region
    $region2: #{actor_critic_forward.1} parent=1 // pred_check
      _
    $region3: #{actor_critic_forward.1} parent=1 // pred_check_branch
      %12 = sbr.rel (0) target = $region5
    $region4: #{actor_critic_forward.1} parent=1 // pred_region
      _
    $region5: #{actor_critic_forward.1} parent=1 // pred_fallthru
      _
    // Predicated region
    $region6: #{actor_critic_forward.1} parent=1 // pred_check
      _
    $region7: #{actor_critic_forward.1} parent=1 // pred_check_branch
      %14 = sbr.rel (0) target = $region9
    $region8: #{actor_critic_forward.1} parent=1 // pred_region
      _
    $region9: #{actor_critic_forward.1} parent=1 // pred_fallthru
      _
    // Predicated region
    $region10: #{actor_critic_forward.1} parent=1 // pred_check
      _
    $region11: #{actor_critic_forward.1} parent=1 // pred_check_branch
      %16 = sbr.rel (0) target = $region13
    $region12: #{actor_critic_forward.1} parent=1 // pred_region
      _
    $region13: #{actor_critic_forward.1} parent=1 // pred_fallthru
      _
    // Predicated region
    $region14: #{actor_critic_forward.1} parent=1 // pred_check
      _
    $region15: #{actor_critic_forward.1} parent=1 // pred_check_branch
      %18 = sbr.rel (0) target = $region17
    $region16: #{actor_critic_forward.1} parent=1 // pred_region
      %s20 = ssub.s32 1024, 1024
      %21 = vsyncadd [#allocation3], %s20
      %s22 = sshll.u32 [#allocation2], 4
      %s23 = int_to_ptr.vmem [resolvable:$true] %s22
      %28 = dma.hbm_to_vmem [thread:$0]  %s3, 1024, %s23, [#allocation3], 64, 64, 4
    $region17: #{actor_critic_forward.1} parent=1 // pred_fallthru
      _
    // Predicated region
    $region18: #{actor_critic_forward.1} parent=1 // pred_check
      _
    $region19: #{actor_critic_forward.1} parent=1 // pred_check_branch
      %30 = sbr.rel (0) target = $region21
    $region20: #{actor_critic_forward.1} parent=1 // pred_region
      _
    $region21: #{actor_critic_forward.1} parent=1 // pred_fallthru
      _
    // Predicated region
    $region22: #{actor_critic_forward.1} parent=1 // pred_check
      _
    $region23: #{actor_critic_forward.1} parent=1 // pred_check_branch
      %32 = sbr.rel (0) target = $region25
    $region24: #{actor_critic_forward.1} parent=1 // pred_region
      %33 = dma.done [#allocation3], 1024
    $region25: #{actor_critic_forward.1} parent=1 // pred_fallthru
      _
    %v35 = vld [vmem:[%s0] sm:$0xff]
    %v36 = vld [vmem:[%s0 + $0x8] sm:$0xff]
    %v37 = vpack.c.bf16 %v36, %v35
    %v38 = vld [vmem:[%s1] sm:$0xf]
    %v39 = vld [vmem:[%s1 + $0x4] sm:$0xf]
    %v40 = vld [vmem:[%s1 + $0x8] sm:$0xf]
    %v41 = vld [vmem:[%s1 + $0xc] sm:$0xf]
    %v42 = vld [vmem:[%s2] sm:$0x1]
    %v44 = vlaneseq
    %v45 = vshrl.u32 %v44, 7
    %v46 = vsub.s32 0, %v45
    %v47 = vrot.slane %v42, %v46
    %v53 = vunpack.c.l.b16 %v38
    %v54 = vunpack.c.l.b16 %v39
    %v55 = vunpack.c.l.b16 %v40
    %v56 = vunpack.c.l.b16 %v41
    %v57 = vpack.c.b16 %v54, %v53
    %v58 = vpack.c.b16 %v56, %v55
    %vm61 = vcmask 261120
    %v63 = vsel %vm61, %v37, 0
    %65 = vmatprep.subr.bf16.mxu0 0
    %66 = vmatpush1.bf16.msra.mxu0 0
    %67 = vmatprep.subr.bf16.mxu0 0
    %68 = vmatpush1.bf16.msra.mxu0 0
    %69 = vmatprep.subr.bf16.mxu0 0
    %70 = vmatpush1.bf16.msra.mxu0 0
    %71 = vmatprep.subr.bf16.mxu0 0
    %72 = vmatpush1.bf16.msra.mxu0 0
    %73 = vmatprep.subr.bf16.mxu0 0
    %74 = vmatpush1.bf16.msra.mxu0 0
    %75 = vmatprep.subr.bf16.mxu0 0
    %76 = vmatpush1.bf16.msra.mxu0 0
    %77 = vmatprep.subr.bf16.mxu0 0
    %78 = vmatpush1.bf16.msra.mxu0 %v58
    %79 = vmatprep.subr.bf16.mxu0 0
    %80 = vmatpush1.bf16.msra.mxu0 %v57
    %81 = vmatprep.subr.bf16.mxu0 0
    %82 = vmatpush2.bf16.msra.mxu0 0
    %83 = vmatprep.subr.bf16.mxu0 0
    %84 = vmatpush2.bf16.msra.mxu0 0
    %85 = vmatprep.subr.bf16.mxu0 0
    %86 = vmatpush2.bf16.msra.mxu0 0
    %87 = vmatprep.subr.bf16.mxu0 0
    %88 = vmatpush2.bf16.msra.mxu0 0
    %89 = vmatprep.subr.bf16.mxu0 0
    %90 = vmatpush2.bf16.msra.mxu0 0
    %91 = vmatprep.subr.bf16.mxu0 0
    %92 = vmatpush2.bf16.msra.mxu0 0
    %93 = vmatprep.subr.bf16.mxu0 0
    %94 = vmatpush2.bf16.msra.mxu0 0
    %95 = vmatprep.subr.bf16.mxu0 0
    %96 = vmatpush2.bf16.msra.mxu0 0
    %97 = vmatprep.mubr.bf16.mxu0 0
    %98 = vmatmul.mubr.bf16.gmra.mxu0 %v63
    %v99 = vpop.f32.mrf.mxu0
    %v100 = vadd.f32 %v47, %v99
    %v101 = vpop.f32.mrf.mxu0
    %v102 = vpop.f32.mrf.mxu0
    %v103 = vadd.f32 %v47, %v102
    %v104 = vpop.f32.mrf.mxu0
    %105 = vdwg.mxu0
    %v106 = vmax.f32 %v100, 0.0
    %v107 = vmax.f32 %v103, 0.0
    %v108 = vpack.c.bf16 %v107, %v106
    %v109 = vld [vmem:[#allocation2] sm:$0xf]
    %v110 = vld [vmem:[#allocation2 + $0x4] sm:$0xf]
    %v111 = vld [vmem:[#allocation2 + $0x8] sm:$0xf]
    %v112 = vld [vmem:[#allocation2 + $0xc] sm:$0xf]
    %v113 = vld [vmem:[#allocation2 + $0x10] sm:$0xf]
    %v114 = vld [vmem:[#allocation2 + $0x14] sm:$0xf]
    %v115 = vld [vmem:[#allocation2 + $0x18] sm:$0xf]
    %v116 = vld [vmem:[#allocation2 + $0x1c] sm:$0xf]
    %v117 = vld [vmem:[#allocation2 + $0x20] sm:$0xf]
    %v118 = vld [vmem:[#allocation2 + $0x24] sm:$0xf]
    %v119 = vld [vmem:[#allocation2 + $0x28] sm:$0xf]
    %v120 = vld [vmem:[#allocation2 + $0x2c] sm:$0xf]
    %v121 = vld [vmem:[#allocation2 + $0x30] sm:$0xf]
    %v122 = vld [vmem:[#allocation2 + $0x34] sm:$0xf]
    %v123 = vld [vmem:[#allocation2 + $0x38] sm:$0xf]
    %v124 = vld [vmem:[#allocation2 + $0x3c] sm:$0xf]
    %v125 = vld [vmem:[%s4] sm:$0x1]
    %v127 = vlaneseq
    %v128 = vshrl.u32 %v127, 7
    %v129 = vsub.s32 0, %v128
    %v130 = vrot.slane %v125, %v129
    %v148 = vunpack.c.l.b16 %v109
    %v149 = vunpack.c.l.b16 %v110
    %v150 = vunpack.c.l.b16 %v111
    %v151 = vunpack.c.l.b16 %v112
    %v152 = vunpack.c.l.b16 %v113
    %v153 = vunpack.c.l.b16 %v114
    %v154 = vunpack.c.l.b16 %v115
    %v155 = vunpack.c.l.b16 %v116
    %v156 = vunpack.c.l.b16 %v117
    %v157 = vunpack.c.l.b16 %v118
    %v158 = vunpack.c.l.b16 %v119
    %v159 = vunpack.c.l.b16 %v120
    %v160 = vunpack.c.l.b16 %v121
    %v161 = vunpack.c.l.b16 %v122
    %v162 = vunpack.c.l.b16 %v123
    %v163 = vunpack.c.l.b16 %v124
    %v164 = vpack.c.b16 %v149, %v148
    %v165 = vpack.c.b16 %v151, %v150
    %v166 = vpack.c.b16 %v153, %v152
    %v167 = vpack.c.b16 %v155, %v154
    %v168 = vpack.c.b16 %v157, %v156
    %v169 = vpack.c.b16 %v159, %v158
    %v170 = vpack.c.b16 %v161, %v160
    %v171 = vpack.c.b16 %v163, %v162
    %180 = vmatprep.subr.bf16.mxu0 0
    %181 = vmatpush1.bf16.msra.mxu0 %v171
    %182 = vmatprep.subr.bf16.mxu0 0
    %183 = vmatpush1.bf16.msra.mxu0 %v170
    %184 = vmatprep.subr.bf16.mxu0 0
    %185 = vmatpush1.bf16.msra.mxu0 %v169
    %186 = vmatprep.subr.bf16.mxu0 0
    %187 = vmatpush1.bf16.msra.mxu0 %v168
    %188 = vmatprep.subr.bf16.mxu0 0
    %189 = vmatpush1.bf16.msra.mxu0 %v167
    %190 = vmatprep.subr.bf16.mxu0 0
    %191 = vmatpush1.bf16.msra.mxu0 %v166
    %192 = vmatprep.subr.bf16.mxu0 0
    %193 = vmatpush1.bf16.msra.mxu0 %v165
    %194 = vmatprep.subr.bf16.mxu0 0
    %195 = vmatpush1.bf16.msra.mxu0 %v164
    %196 = vmatprep.subr.bf16.mxu0 0
    %197 = vmatpush2.bf16.msra.mxu0 0
    %198 = vmatprep.subr.bf16.mxu0 0
    %199 = vmatpush2.bf16.msra.mxu0 0
    %200 = vmatprep.subr.bf16.mxu0 0
    %201 = vmatpush2.bf16.msra.mxu0 0
    %202 = vmatprep.subr.bf16.mxu0 0
    %203 = vmatpush2.bf16.msra.mxu0 0
    %204 = vmatprep.subr.bf16.mxu0 0
    %205 = vmatpush2.bf16.msra.mxu0 0
    %206 = vmatprep.subr.bf16.mxu0 0
    %207 = vmatpush2.bf16.msra.mxu0 0
    %208 = vmatprep.subr.bf16.mxu0 0
    %209 = vmatpush2.bf16.msra.mxu0 0
    %210 = vmatprep.subr.bf16.mxu0 0
    %211 = vmatpush2.bf16.msra.mxu0 0
    %212 = vmatprep.mubr.bf16.mxu0 0
    %213 = vmatmul.mubr.bf16.gmra.mxu0 %v108
    %v214 = vpop.f32.mrf.mxu0
    %v215 = vadd.f32 %v130, %v214
    %v216 = vpop.f32.mrf.mxu0
    %v217 = vpop.f32.mrf.mxu0
    %v218 = vadd.f32 %v130, %v217
    %v219 = vpop.f32.mrf.mxu0
    %220 = vdwg.mxu0
    %v221 = vpack.c.bf16 %v218, %v215
    %v223 = vunpack.c.l.b16 %v221
    %v224 = vunpack.c.h.b16 %v221
    %v225 = vpack.c.b16 %v223, %v223
    %v226 = vpack.c.b16 %v224, %v224
    %229 = vst [vmem:[%s5] sm:$0xf] %v225
    %230 = vst [vmem:[%s5 + $0x4] sm:$0xf] %v226
    // Predicated region
    $region26: #{actor_critic_forward.1} parent=1 // pred_check
      _
    $region27: #{actor_critic_forward.1} parent=1 // pred_check_branch
      %232 = sbr.rel (0) target = $region29
    $region28: #{actor_critic_forward.1} parent=1 // pred_region
      _
    $region29: #{actor_critic_forward.1} parent=1 // pred_fallthru
      _
    // Predicated region
    $region30: #{actor_critic_forward.1} parent=1 // pred_check
      _
    $region31: #{actor_critic_forward.1} parent=1 // pred_check_branch
      %234 = sbr.rel (0) target = $region33
    $region32: #{actor_critic_forward.1} parent=1 // pred_region
      _
    $region33: #{actor_critic_forward.1} parent=1 // pred_fallthru
      _
    %235 = vsyncpa [#allocation3], 1

</llo_original>
